<compile_context>
chip_gen: v5e
topology: v5e:2x2
jax: 0.10.0
libtpu: 0.0.40
codegen_flags: <defaults>
</compile_context>

<pallas_src>
import functools

import jax
import jax.numpy as jnp
from jax.experimental import pallas as pl
from jax.experimental.pallas import tpu as pltpu


def _sublane_multiple(dtype) -> int:
    """Rows-per-vreg packing for the second-minor axis."""
    bits = jnp.dtype(dtype).itemsize * 8
    if bits >= 32:
        return 8
    if bits == 16:
        return 16
    return 32


def _round_up(x: int, m: int) -> int:
    return ((x + m - 1) // m) * m


def _vmem_capacity_bytes() -> int:
    try:
        return int(pltpu.get_tpu_info().vmem_capacity_bytes)
    except Exception:
        return 128 * 1024 * 1024  # v5e/v6e default


# --------------------------------------------------------------------------- #
# Kernels
# --------------------------------------------------------------------------- #
def _rmsnorm_kernel(x_ref, w_ref, o_ref, *, eps):
    # x_ref: (tm, D), w_ref: (1, D) f32, o_ref: (tm, D)
    xf = x_ref[...].astype(jnp.float32)
    ms = jnp.mean(xf * xf, axis=-1, keepdims=True)          # per-row f32 reduce
    o_ref[...] = (xf * jax.lax.rsqrt(ms + eps) * w_ref[...]).astype(o_ref.dtype)


def _rmsnorm_packed_kernel(x_ref, w_ref, seg_ref, o_ref, *, eps):
    # x_ref: (tm, k*dim) holds k original rows per sublane row (lane-dense).
    # seg_ref: (k*dim, k*dim) block-diagonal matrix with 1/dim in each
    #          dim-wide segment -> one MXU matmul performs the segmented
    #          per-original-row mean and broadcasts it back across the lanes.
    xf = x_ref[...].astype(jnp.float32)
    ms = jnp.dot(xf * xf, seg_ref[...],
                 preferred_element_type=jnp.float32,
                 precision=jax.lax.Precision.HIGHEST)
    o_ref[...] = (xf * jax.lax.rsqrt(ms + eps) * w_ref[...]).astype(o_ref.dtype)


# --------------------------------------------------------------------------- #
# Wrapper
# --------------------------------------------------------------------------- #
def rmsnorm(x, weight, epsilon=1e-6, *, block_rows=None):
    """x: (..., dim); weight: (dim,). Returns same shape/dtype as x."""
    orig_shape = x.shape
    dim = orig_shape[-1]
    rows = 1
    for s in orig_shape[:-1]:
        rows *= s

    x2d = x.reshape(rows, dim)
    eps = float(epsilon)
    in_bytes = jnp.dtype(x.dtype).itemsize
    sub = _sublane_multiple(x.dtype)

    # ---- small-hidden-dim repack: keep the lane axis 128-dense --------------
    pack = 1
    if dim < 128 and 128 % dim == 0 and rows % (128 // dim) == 0:
        pack = 128 // dim
    k_dim = pack * dim      # lane width the kernel sees
    k_rows = rows // pack   # row count the kernel sees

    if pack > 1:
        x2d = x2d.reshape(k_rows, k_dim)
        w2d = jnp.tile(weight.reshape(1, dim).astype(jnp.float32), (1, pack))
        seg_id = jnp.arange(k_dim) // dim
        seg_mat = (seg_id[:, None] == seg_id[None, :]).astype(jnp.float32) / float(dim)
    else:
        w2d = weight.reshape(1, dim).astype(jnp.float32)
        seg_mat = None

    # ---- tile-size selection -------------------------------------------------
    if block_rows is None:
        # Target ~1.5 MiB for the f32 working tile: already at the measured HBM
        # roofline; bigger tiles only add VMEM pressure and shrink the grid.
        target_tile_bytes = 1536 * 1024
        tm = max(sub, target_tile_bytes // (k_dim * 4))
        tm = min(tm, 512)
    else:
        tm = int(block_rows)
    tm = max(sub, (tm // sub) * sub)                      # sublane-packed rows
    tm = min(tm, max(sub, _round_up(k_rows, sub)))        # never exceed total rows

    grid_m = pl.cdiv(k_rows, tm)
    # v7x has 2 TensorCores per chip: prefer an even number of grid steps.
    if grid_m % 2 == 1:
        if grid_m == 1:
            if k_rows >= 2 * sub:
                tm = _round_up(pl.cdiv(k_rows, 2), sub)
                grid_m = pl.cdiv(k_rows, tm)
        else:
            tm2 = max(sub, _round_up(pl.cdiv(k_rows, grid_m + 1), sub))
            if pl.cdiv(k_rows, tm2) % 2 == 0:
                tm, grid_m = tm2, pl.cdiv(k_rows, tm2)

    # ---- VMEM accounting (incl. f32 intermediates) + generation-aware limit ---
    live_bytes = (
        4 * tm * k_dim * in_bytes                       # 2x input + 2x output buffers
        + 2 * tm * k_dim * 4                            # f32 cast + product tiles
        + 2 * k_dim * 4                                 # resident f32 weight
        + (2 * k_dim * k_dim * 4 if seg_mat is not None else 0)
    )
    vmem_cap = _vmem_capacity_bytes()
    limit_cap = 48 * 1024 * 1024 if vmem_cap <= 64 * 1024 * 1024 else 64 * 1024 * 1024
    vmem_limit = int(min(limit_cap, max(16 * 1024 * 1024, 2 * live_bytes)))

    # ---- pallas_call (ragged last tile: no pad / slice) ----------------------
    if seg_mat is None:
        kernel = functools.partial(_rmsnorm_kernel, eps=eps)
        in_specs = [
            pl.BlockSpec((tm, k_dim), lambda i: (i, 0)),
            pl.BlockSpec((1, k_dim), lambda i: (0, 0)),       # weight resident
        ]
        operands = (x2d, w2d)
    else:
        kernel = functools.partial(_rmsnorm_packed_kernel, eps=eps)
        in_specs = [
            pl.BlockSpec((tm, k_dim), lambda i: (i, 0)),
            pl.BlockSpec((1, k_dim), lambda i: (0, 0)),       # weight resident
            pl.BlockSpec((k_dim, k_dim), lambda i: (0, 0)),   # seg matrix resident
        ]
        operands = (x2d, w2d, seg_mat)

    out = pl.pallas_call(
        kernel,
        out_shape=jax.ShapeDtypeStruct((k_rows, k_dim), x.dtype),
        grid_spec=pltpu.PrefetchScalarGridSpec(
            num_scalar_prefetch=0,
            grid=(grid_m,),
            in_specs=in_specs,
            out_specs=pl.BlockSpec((tm, k_dim), lambda i: (i, 0)),
        ),
        compiler_params=pltpu.CompilerParams(
            dimension_semantics=("parallel",),
            vmem_limit_bytes=vmem_limit,
        ),
    )(*operands)

    return out.reshape(orig_shape)


# --------------------------------------------------------------------------- #
# Reference + self-test
# --------------------------------------------------------------------------- #
def _ref_rmsnorm(x, weight, epsilon):
    xf = x.astype(jnp.float32)
    ms = jnp.mean(xf * xf, axis=-1, keepdims=True)
    return (xf * jax.lax.rsqrt(ms + epsilon) * weight.astype(jnp.float32)).astype(x.dtype)


if __name__ == "__main__":
    key = jax.random.PRNGKey(0)

    # Case 1: small f32 shape matching the module's forward (batch, seq, hidden);
    # hidden=32 exercises the lane-dense repack path (4 rows packed per 128 lanes).
    batch, seq, hidden = 2, 8, 32
    x = jax.random.normal(key, (batch, seq, hidden), dtype=jnp.float32)
    weight = jnp.ones((hidden,), dtype=jnp.float32)   # nn.Parameter(torch.ones(dim))

    y = jax.block_until_ready(rmsnorm(x, weight, epsilon=1e-6))
    ref = _ref_rmsnorm(x, weight, 1e-6)
    assert y.shape == x.shape and y.dtype == x.dtype
    assert jnp.allclose(y, ref, atol=1e-5, rtol=1e-5), "f32 (dim=32) mismatch vs reference"

    # Case 2: bf16, row count not a multiple of the tile -> ragged last block.
    k2 = jax.random.PRNGKey(0)
    x2 = jax.random.normal(k2, (3, 5, 128), dtype=jnp.bfloat16)
    w2 = jnp.ones((128,), dtype=jnp.bfloat16)
    y2 = jax.block_until_ready(rmsnorm(x2, w2, epsilon=1e-6))
    ref2 = _ref_rmsnorm(x2, w2, 1e-6)
    assert y2.shape == x2.shape and y2.dtype == x2.dtype
    assert jnp.allclose(y2.astype(jnp.float32), ref2.astype(jnp.float32),
                        atol=2e-2, rtol=2e-2), "bf16 mismatch vs reference"

    # Case 3: f32, multi-step grid with a ragged final tile (rows=148, dim=256).
    k3 = jax.random.PRNGKey(0)
    x3 = jax.random.normal(k3, (4, 37, 256), dtype=jnp.float32)
    w3 = jnp.ones((256,), dtype=jnp.float32)
    y3 = jax.block_until_ready(rmsnorm(x3, w3, epsilon=1e-6))
    ref3 = _ref_rmsnorm(x3, w3, 1e-6)
    assert y3.shape == x3.shape and y3.dtype == x3.dtype
    assert jnp.allclose(y3, ref3, atol=1e-5, rtol=1e-5), "f32 ragged-grid mismatch vs reference"

    print("KERNEL_OK")
</pallas_src>

<mosaic_0001>
module attributes {stable_mosaic.version = 11 : i64} {
  func.func @_rmsnorm_packed_kernel(%arg0: i32, %arg1: memref<8x128xf32, #tpu.memory_space<vmem>>, %arg2: memref<1x128xf32, #tpu.memory_space<vmem>>, %arg3: memref<128x128xf32, #tpu.memory_space<vmem>>, %arg4: memref<8x128xf32, #tpu.memory_space<vmem>>) attributes {dimension_semantics = [#tpu.dimension_semantics<parallel>], iteration_bounds = array<i64: 1>, scalar_prefetch = 0 : i64, scratch_operands = 0 : i64, tpu.core_type = #tpu.core_type<tc>, window_params = [{transform_indices = @transform_0, window_bounds = array<i64: 8, 128>}, {pipeline_mode = #tpu.pipeline_mode<synchronous>, transform_indices = @transform_1, window_bounds = array<i64: 1, 128>}, {pipeline_mode = #tpu.pipeline_mode<synchronous>, transform_indices = @transform_2, window_bounds = array<i64: 128, 128>}, {transform_indices = @transform_3, window_bounds = array<i64: 8, 128>}]} {
    %c0 = arith.constant 0 : index
    %c0_0 = arith.constant 0 : index
    %0 = vector.load %arg1[%c0, %c0_0] : memref<8x128xf32, #tpu.memory_space<vmem>>, vector<8x128xf32>
    %1 = arith.mulf %0, %0 : vector<8x128xf32>
    %c0_1 = arith.constant 0 : index
    %c0_2 = arith.constant 0 : index
    %2 = vector.load %arg3[%c0_1, %c0_2] : memref<128x128xf32, #tpu.memory_space<vmem>>, vector<128x128xf32>
    %cst = arith.constant dense<0.000000e+00> : vector<8x128xf32>
    %3 = tpu.matmul %1, %2, %cst {dimension_numbers = #tpu.dot_dimension_numbers<[1], [0], [0], [1], [0, 0, 1, 1], [], []>, precision = #tpu.contract_precision<fp32>} : vector<8x128xf32>, vector<128x128xf32>, vector<8x128xf32> -> vector<8x128xf32>
    %cst_3 = arith.constant 9.99999997E-7 : f32
    %4 = vector.broadcast %cst_3 : f32 to vector<8x128xf32>
    %5 = arith.addf %3, %4 : vector<8x128xf32>
    %6 = math.rsqrt %5 : vector<8x128xf32>
    %7 = arith.mulf %0, %6 : vector<8x128xf32>
    %c0_4 = arith.constant 0 : index
    %c0_5 = arith.constant 0 : index
    %8 = vector.load %arg2[%c0_4, %c0_5] : memref<1x128xf32, #tpu.memory_space<vmem>>, vector<1x128xf32>
    %9 = vector.broadcast %8 : vector<1x128xf32> to vector<8x128xf32>
    %10 = arith.mulf %7, %9 : vector<8x128xf32>
    %c0_6 = arith.constant 0 : index
    %c0_7 = arith.constant 0 : index
    %11 = vector.load %arg4[%c0_6, %c0_7] : memref<8x128xf32, #tpu.memory_space<vmem>>, vector<8x128xf32>
    tpu.vector_store %arg4[%c0_6, %c0_7], %10 {strides = array<i32>} : memref<8x128xf32, #tpu.memory_space<vmem>>, vector<8x128xf32>,
    return
  }
  func.func @transform_0(%arg0: i32) -> (i32, i32) {
    %c0_i32 = arith.constant 0 : i32
    %c0_i32_0 = arith.constant 0 : i32
    return %arg0, %c0_i32 : i32, i32
  }
  func.func @transform_1(%arg0: i32) -> (i32, i32) {
    %c0_i32 = arith.constant 0 : i32
    %c0_i32_0 = arith.constant 0 : i32
    %c0_i32_1 = arith.constant 0 : i32
    return %c0_i32, %c0_i32_0 : i32, i32
  }
  func.func @transform_2(%arg0: i32) -> (i32, i32) {
    %c0_i32 = arith.constant 0 : i32
    %c0_i32_0 = arith.constant 0 : i32
    %c0_i32_1 = arith.constant 0 : i32
    return %c0_i32, %c0_i32_0 : i32, i32
  }
  func.func @transform_3(%arg0: i32) -> (i32, i32) {
    %c0_i32 = arith.constant 0 : i32
    %c0_i32_0 = arith.constant 0 : i32
    return %arg0, %c0_i32 : i32, i32
  }
}

</mosaic_0001>

<llo_original>
// kernel: tpu_custom_call.1
$region0: #{tpu_custom_call.1}
  #allocation0 [shape = 'u32[]', space=smem, size = 0x4, offset = 0x4, fixed_abs, tag = 'smem constant byte address 0x4 - core index']
  #allocation1 [shape = 'u32[72,128]{1,0:T(1,128)}', space=vmem, size = 0x9000, scoped, tag = 'internal scratch']
  %s0 = inlined_call_operand.hbm [shape: f32[4,128], index: 0, kind: input, shape index: {}]
  %s1 = inlined_call_operand.hbm [shape: f32[1,128], index: 1, kind: input, shape index: {}]
  %s2 = inlined_call_operand.hbm [shape: f32[128,128], index: 2, kind: input, shape index: {}]
  %s3 = inlined_call_operand.hbm [shape: f32[4,128], index: 3, kind: output, shape index: {}]
  %s4 = sld [smem:[#allocation0]]
  $region34: #{tpu_custom_call.1} parent=0
    _
  %s6 = ssub.s32 1, %s4
  %s7 = scalar_select 0, %s6, %s4
  $region1: #{tpu_custom_call.1} parent=0
    #allocation2 [shape = 'u8[4096]{0}', space=vmem, size = 0x1000, scoped, tag = 'input window, operand 0, single buffered']
    #allocation3 [shape = 's32[1]{0}', space=sflag, size = 0x4, scoped, tag = 'scoped memory for tpu_custom_call.1']
    #allocation4 [shape = 's32[1]{0}', space=sflag, size = 0x4, scoped, tag = 'scoped memory for tpu_custom_call.1']
    #allocation5 [shape = 'u8[512]{0}', space=vmem, size = 0x400, scoped, tag = 'input window, operand 1, single buffered']
    #allocation6 [shape = 's32[1]{0}', space=sflag, size = 0x4, scoped, tag = 'scoped memory for tpu_custom_call.1']
    #allocation7 [shape = 'u8[65536]{0}', space=vmem, size = 0x10000, scoped, tag = 'input window, operand 2, single buffered']
    #allocation8 [shape = 'u8[4096]{0}', space=vmem, size = 0x1000, scoped, tag = 'output window, operand 0, single buffered']
    %8 = vsyncpa [#allocation3], 0
    %9 = vsyncpa [#allocation6], 0
    %10 = vsyncpa [#allocation4], 0
    // Predicated region
    $region2: #{tpu_custom_call.1} parent=1 // pred_check
      _
    $region3: #{tpu_custom_call.1} parent=1 // pred_check_branch
      %12 = sbr.rel (0) target = $region5
    $region4: #{tpu_custom_call.1} parent=1 // pred_region
      %14 = vsyncadd [#allocation3], 64
      %s15 = sshll.u32 %s0, 4
      %s16 = int_to_ptr.hbm [resolvable:$true] %s15
      %s17 = sshll.u32 [#allocation2], 4
      %s18 = int_to_ptr.vmem [resolvable:$true] %s17
      %23 = dma.hbm_to_vmem [thread:$0]  %s16, 64, %s18, [#allocation3], 64, 64, 4
    $region5: #{tpu_custom_call.1} parent=1 // pred_fallthru
      _
    // Predicated region
    $region6: #{tpu_custom_call.1} parent=1 // pred_check
      _
    $region7: #{tpu_custom_call.1} parent=1 // pred_check_branch
      %25 = sbr.rel (0) target = $region9
    $region8: #{tpu_custom_call.1} parent=1 // pred_region
      %27 = vsyncadd [#allocation6], 0
      %s29 = sshll.u32 %s1, 4
      %s30 = int_to_ptr.hbm [resolvable:$true] %s29
      %s31 = sshll.u32 [#allocation5], 4
      %s32 = int_to_ptr.vmem [resolvable:$true] %s31
      %34 = dma.hbm_to_vmem [thread:$0]  %s30, 16, %s32, [#allocation6]
    $region9: #{tpu_custom_call.1} parent=1 // pred_fallthru
      _
    // Predicated region
    $region10: #{tpu_custom_call.1} parent=1 // pred_check
      _
    $region11: #{tpu_custom_call.1} parent=1 // pred_check_branch
      %36 = sbr.rel (0) target = $region13
    $region12: #{tpu_custom_call.1} parent=1 // pred_region
      %38 = vsyncadd [#allocation6], 0
      %s39 = sshll.u32 %s2, 4
      %s40 = int_to_ptr.hbm [resolvable:$true] %s39
      %s41 = sshll.u32 [#allocation7], 4
      %s42 = int_to_ptr.vmem [resolvable:$true] %s41
      %47 = dma.hbm_to_vmem [thread:$0]  %s40, 2048, %s42, [#allocation6], 128, 128, 8
    $region13: #{tpu_custom_call.1} parent=1 // pred_fallthru
      _
    // Predicated region
    $region14: #{tpu_custom_call.1} parent=1 // pred_check
      _
    $region15: #{tpu_custom_call.1} parent=1 // pred_check_branch
      %49 = sbr.rel (0) target = $region17
    $region16: #{tpu_custom_call.1} parent=1 // pred_region
      %51 = dma.done [#allocation3], 128
    $region17: #{tpu_custom_call.1} parent=1 // pred_fallthru
      _
    // Predicated region
    $region18: #{tpu_custom_call.1} parent=1 // pred_check
      _
    $region19: #{tpu_custom_call.1} parent=1 // pred_check_branch
      %53 = sbr.rel (0) target = $region21
    $region20: #{tpu_custom_call.1} parent=1 // pred_region
      %55 = dma.done [#allocation6], 16
    $region21: #{tpu_custom_call.1} parent=1 // pred_fallthru
      _
    // Predicated region
    $region22: #{tpu_custom_call.1} parent=1 // pred_check
      _
    $region23: #{tpu_custom_call.1} parent=1 // pred_check_branch
      %57 = sbr.rel (0) target = $region25
    $region24: #{tpu_custom_call.1} parent=1 // pred_region
      %59 = dma.done [#allocation6], 2048
    $region25: #{tpu_custom_call.1} parent=1 // pred_fallthru
      _
    %v60 = vld [vmem:[#allocation2] sm:$0xff]
    %v61 = vmul.f32 %v60, %v60
    %v62 = vld [vmem:[#allocation7] sm:$0xff]
    %v63 = vld [vmem:[#allocation7 + $0x8] sm:$0xff]
    %v64 = vld [vmem:[#allocation7 + $0x10] sm:$0xff]
    %v65 = vld [vmem:[#allocation7 + $0x18] sm:$0xff]
    %v66 = vld [vmem:[#allocation7 + $0x20] sm:$0xff]
    %v67 = vld [vmem:[#allocation7 + $0x28] sm:$0xff]
    %v68 = vld [vmem:[#allocation7 + $0x30] sm:$0xff]
    %v69 = vld [vmem:[#allocation7 + $0x38] sm:$0xff]
    %v70 = vld [vmem:[#allocation7 + $0x40] sm:$0xff]
    %v71 = vld [vmem:[#allocation7 + $0x48] sm:$0xff]
    %v72 = vld [vmem:[#allocation7 + $0x50] sm:$0xff]
    %v73 = vld [vmem:[#allocation7 + $0x58] sm:$0xff]
    %v74 = vld [vmem:[#allocation7 + $0x60] sm:$0xff]
    %v75 = vld [vmem:[#allocation7 + $0x68] sm:$0xff]
    %v76 = vld [vmem:[#allocation7 + $0x70] sm:$0xff]
    %v77 = vld [vmem:[#allocation7 + $0x78] sm:$0xff]
    %v78 = vand.u32 %v77, 4294901760
    %79 = vmatpush.msra.mxu0 %v78
    %v80 = vand.u32 %v76, 4294901760
    %81 = vmatpush.msra.mxu0 %v80
    %v82 = vand.u32 %v75, 4294901760
    %83 = vmatpush.msra.mxu0 %v82
    %v84 = vand.u32 %v74, 4294901760
    %85 = vmatpush.msra.mxu0 %v84
    %v86 = vand.u32 %v73, 4294901760
    %87 = vmatpush.msra.mxu0 %v86
    %v88 = vand.u32 %v72, 4294901760
    %89 = vmatpush.msra.mxu0 %v88
    %v90 = vand.u32 %v71, 4294901760
    %91 = vmatpush.msra.mxu0 %v90
    %v92 = vand.u32 %v70, 4294901760
    %93 = vmatpush.msra.mxu0 %v92
    %v94 = vand.u32 %v69, 4294901760
    %95 = vmatpush.msra.mxu0 %v94
    %v96 = vand.u32 %v68, 4294901760
    %97 = vmatpush.msra.mxu0 %v96
    %v98 = vand.u32 %v67, 4294901760
    %99 = vmatpush.msra.mxu0 %v98
    %v100 = vand.u32 %v66, 4294901760
    %101 = vmatpush.msra.mxu0 %v100
    %v102 = vand.u32 %v65, 4294901760
    %103 = vmatpush.msra.mxu0 %v102
    %v104 = vand.u32 %v64, 4294901760
    %105 = vmatpush.msra.mxu0 %v104
    %v106 = vand.u32 %v63, 4294901760
    %107 = vmatpush.msra.mxu0 %v106
    %v108 = vand.u32 %v62, 4294901760
    %109 = vmatpush.msra.mxu0 %v108
    %v110 = vand.u32 %v61, 4294901760
    %v111 = vsub.f32 %v61, %v110
    %v112 = vand.u32 %v111, 4294901760
    %v113 = vsub.f32 %v111, %v112
    %v114 = vand.u32 %v113, 4294901760
    %115 = vmatmul.f32.gmra.mxu0 %v114
    %v116 = vpop.f32.mrf.mxu0
    %v117 = vadd.f32 1e-06, %v116
    %118 = vdwg.mxu0
    %v119 = vand.u32 %v77, 4294901760
    %v120 = vsub.f32 %v77, %v119
    %v121 = vand.u32 %v120, 4294901760
    %v122 = vsub.f32 %v120, %v121
    %v123 = vand.u32 %v122, 4294901760
    %124 = vmatpush.msra.mxu0 %v123
    %v125 = vand.u32 %v76, 4294901760
    %v126 = vsub.f32 %v76, %v125
    %v127 = vand.u32 %v126, 4294901760
    %v128 = vsub.f32 %v126, %v127
    %v129 = vand.u32 %v128, 4294901760
    %130 = vmatpush.msra.mxu0 %v129
    %v131 = vand.u32 %v75, 4294901760
    %v132 = vsub.f32 %v75, %v131
    %v133 = vand.u32 %v132, 4294901760
    %v134 = vsub.f32 %v132, %v133
    %v135 = vand.u32 %v134, 4294901760
    %136 = vmatpush.msra.mxu0 %v135
    %v137 = vand.u32 %v74, 4294901760
    %v138 = vsub.f32 %v74, %v137
    %v139 = vand.u32 %v138, 4294901760
    %v140 = vsub.f32 %v138, %v139
    %v141 = vand.u32 %v140, 4294901760
    %142 = vmatpush.msra.mxu0 %v141
    %v143 = vand.u32 %v73, 4294901760
    %v144 = vsub.f32 %v73, %v143
    %v145 = vand.u32 %v144, 4294901760
    %v146 = vsub.f32 %v144, %v145
    %v147 = vand.u32 %v146, 4294901760
    %148 = vmatpush.msra.mxu0 %v147
    %v149 = vand.u32 %v72, 4294901760
    %v150 = vsub.f32 %v72, %v149
    %v151 = vand.u32 %v150, 4294901760
    %v152 = vsub.f32 %v150, %v151
    %v153 = vand.u32 %v152, 4294901760
    %154 = vmatpush.msra.mxu0 %v153
    %v155 = vand.u32 %v71, 4294901760
    %v156 = vsub.f32 %v71, %v155
    %v157 = vand.u32 %v156, 4294901760
    %v158 = vsub.f32 %v156, %v157
    %v159 = vand.u32 %v158, 4294901760
    %160 = vmatpush.msra.mxu0 %v159
    %v161 = vand.u32 %v70, 4294901760
    %v162 = vsub.f32 %v70, %v161
    %v163 = vand.u32 %v162, 4294901760
    %v164 = vsub.f32 %v162, %v163
    %v165 = vand.u32 %v164, 4294901760
    %166 = vmatpush.msra.mxu0 %v165
    %v167 = vand.u32 %v69, 4294901760
    %v168 = vsub.f32 %v69, %v167
    %v169 = vand.u32 %v168, 4294901760
    %v170 = vsub.f32 %v168, %v169
    %v171 = vand.u32 %v170, 4294901760
    %172 = vmatpush.msra.mxu0 %v171
    %v173 = vand.u32 %v68, 4294901760
    %v174 = vsub.f32 %v68, %v173
    %v175 = vand.u32 %v174, 4294901760
    %v176 = vsub.f32 %v174, %v175
    %v177 = vand.u32 %v176, 4294901760
    %178 = vmatpush.msra.mxu0 %v177
    %v179 = vand.u32 %v67, 4294901760
    %v180 = vsub.f32 %v67, %v179
    %v181 = vand.u32 %v180, 4294901760
    %v182 = vsub.f32 %v180, %v181
    %v183 = vand.u32 %v182, 4294901760
    %184 = vmatpush.msra.mxu0 %v183
    %v185 = vand.u32 %v66, 4294901760
    %v186 = vsub.f32 %v66, %v185
    %v187 = vand.u32 %v186, 4294901760
    %v188 = vsub.f32 %v186, %v187
    %v189 = vand.u32 %v188, 4294901760
    %190 = vmatpush.msra.mxu0 %v189
    %v191 = vand.u32 %v65, 4294901760
    %v192 = vsub.f32 %v65, %v191
    %v193 = vand.u32 %v192, 4294901760
    %v194 = vsub.f32 %v192, %v193
    %v195 = vand.u32 %v194, 4294901760
    %196 = vmatpush.msra.mxu0 %v195
    %v197 = vand.u32 %v64, 4294901760
    %v198 = vsub.f32 %v64, %v197
    %v199 = vand.u32 %v198, 4294901760
    %v200 = vsub.f32 %v198, %v199
    %v201 = vand.u32 %v200, 4294901760
    %202 = vmatpush.msra.mxu0 %v201
    %v203 = vand.u32 %v63, 4294901760
    %v204 = vsub.f32 %v63, %v203
    %v205 = vand.u32 %v204, 4294901760
    %v206 = vsub.f32 %v204, %v205
    %v207 = vand.u32 %v206, 4294901760
    %208 = vmatpush.msra.mxu0 %v207
    %v209 = vand.u32 %v62, 4294901760
    %v210 = vsub.f32 %v62, %v209
    %v211 = vand.u32 %v210, 4294901760
    %v212 = vsub.f32 %v210, %v211
    %v213 = vand.u32 %v212, 4294901760
    %214 = vmatpush.msra.mxu0 %v213
    %v215 = vand.u32 %v61, 4294901760
    %216 = vmatmul.f32.gmra.mxu0 %v215
    %v217 = vpop.f32.mrf.mxu0
    %v218 = vadd.f32 %v117, %v217
    %219 = vdwg.mxu0
    %v220 = vand.u32 %v77, 4294901760
    %v221 = vsub.f32 %v77, %v220
    %222 = vmatpush.msra.mxu0 %v221
    %v223 = vand.u32 %v76, 4294901760
    %v224 = vsub.f32 %v76, %v223
    %225 = vmatpush.msra.mxu0 %v224
    %v226 = vand.u32 %v75, 4294901760
    %v227 = vsub.f32 %v75, %v226
    %228 = vmatpush.msra.mxu0 %v227
    %v229 = vand.u32 %v74, 4294901760
    %v230 = vsub.f32 %v74, %v229
    %231 = vmatpush.msra.mxu0 %v230
    %v232 = vand.u32 %v73, 4294901760
    %v233 = vsub.f32 %v73, %v232
    %234 = vmatpush.msra.mxu0 %v233
    %v235 = vand.u32 %v72, 4294901760
    %v236 = vsub.f32 %v72, %v235
    %237 = vmatpush.msra.mxu0 %v236
    %v238 = vand.u32 %v71, 4294901760
    %v239 = vsub.f32 %v71, %v238
    %240 = vmatpush.msra.mxu0 %v239
    %v241 = vand.u32 %v70, 4294901760
    %v242 = vsub.f32 %v70, %v241
    %243 = vmatpush.msra.mxu0 %v242
    %v244 = vand.u32 %v69, 4294901760
    %v245 = vsub.f32 %v69, %v244
    %246 = vmatpush.msra.mxu0 %v245
    %v247 = vand.u32 %v68, 4294901760
    %v248 = vsub.f32 %v68, %v247
    %249 = vmatpush.msra.mxu0 %v248
    %v250 = vand.u32 %v67, 4294901760
    %v251 = vsub.f32 %v67, %v250
    %252 = vmatpush.msra.mxu0 %v251
    %v253 = vand.u32 %v66, 4294901760
    %v254 = vsub.f32 %v66, %v253
    %255 = vmatpush.msra.mxu0 %v254
    %v256 = vand.u32 %v65, 4294901760
    %v257 = vsub.f32 %v65, %v256
    %258 = vmatpush.msra.mxu0 %v257
    %v259 = vand.u32 %v64, 4294901760
    %v260 = vsub.f32 %v64, %v259
    %261 = vmatpush.msra.mxu0 %v260
    %v262 = vand.u32 %v63, 4294901760
    %v263 = vsub.f32 %v63, %v262
    %264 = vmatpush.msra.mxu0 %v263
    %v265 = vand.u32 %v62, 4294901760
    %v266 = vsub.f32 %v62, %v265
    %267 = vmatpush.msra.mxu0 %v266
    %v268 = vand.u32 %v61, 4294901760
    %v269 = vsub.f32 %v61, %v268
    %270 = vmatmul.f32.gmra.mxu0 %v269
    %v271 = vpop.f32.mrf.mxu0
    %v272 = vadd.f32 %v218, %v271
    %273 = vdwg.mxu0
    %v274 = vand.u32 %v77, 4294901760
    %275 = vmatpush.msra.mxu0 %v274
    %v276 = vand.u32 %v76, 4294901760
    %277 = vmatpush.msra.mxu0 %v276
    %v278 = vand.u32 %v75, 4294901760
    %279 = vmatpush.msra.mxu0 %v278
    %v280 = vand.u32 %v74, 4294901760
    %281 = vmatpush.msra.mxu0 %v280
    %v282 = vand.u32 %v73, 4294901760
    %283 = vmatpush.msra.mxu0 %v282
    %v284 = vand.u32 %v72, 4294901760
    %285 = vmatpush.msra.mxu0 %v284
    %v286 = vand.u32 %v71, 4294901760
    %287 = vmatpush.msra.mxu0 %v286
    %v288 = vand.u32 %v70, 4294901760
    %289 = vmatpush.msra.mxu0 %v288
    %v290 = vand.u32 %v69, 4294901760
    %291 = vmatpush.msra.mxu0 %v290
    %v292 = vand.u32 %v68, 4294901760
    %293 = vmatpush.msra.mxu0 %v292
    %v294 = vand.u32 %v67, 4294901760
    %295 = vmatpush.msra.mxu0 %v294
    %v296 = vand.u32 %v66, 4294901760
    %297 = vmatpush.msra.mxu0 %v296
    %v298 = vand.u32 %v65, 4294901760
    %299 = vmatpush.msra.mxu0 %v298
    %v300 = vand.u32 %v64, 4294901760
    %301 = vmatpush.msra.mxu0 %v300
    %v302 = vand.u32 %v63, 4294901760
    %303 = vmatpush.msra.mxu0 %v302
    %v304 = vand.u32 %v62, 4294901760
    %305 = vmatpush.msra.mxu0 %v304
    %v306 = vand.u32 %v61, 4294901760
    %v307 = vsub.f32 %v61, %v306
    %v308 = vand.u32 %v307, 4294901760
    %309 = vmatmul.f32.gmra.mxu0 %v308
    %v310 = vpop.f32.mrf.mxu0
    %v311 = vadd.f32 %v272, %v310
    %312 = vdwg.mxu0
    %v313 = vand.u32 %v77, 4294901760
    %v314 = vsub.f32 %v77, %v313
    %v315 = vand.u32 %v314, 4294901760
    %316 = vmatpush.msra.mxu0 %v315
    %v317 = vand.u32 %v76, 4294901760
    %v318 = vsub.f32 %v76, %v317
    %v319 = vand.u32 %v318, 4294901760
    %320 = vmatpush.msra.mxu0 %v319
    %v321 = vand.u32 %v75, 4294901760
    %v322 = vsub.f32 %v75, %v321
    %v323 = vand.u32 %v322, 4294901760
    %324 = vmatpush.msra.mxu0 %v323
    %v325 = vand.u32 %v74, 4294901760
    %v326 = vsub.f32 %v74, %v325
    %v327 = vand.u32 %v326, 4294901760
    %328 = vmatpush.msra.mxu0 %v327
    %v329 = vand.u32 %v73, 4294901760
    %v330 = vsub.f32 %v73, %v329
    %v331 = vand.u32 %v330, 4294901760
    %332 = vmatpush.msra.mxu0 %v331
    %v333 = vand.u32 %v72, 4294901760
    %v334 = vsub.f32 %v72, %v333
    %v335 = vand.u32 %v334, 4294901760
    %336 = vmatpush.msra.mxu0 %v335
    %v337 = vand.u32 %v71, 4294901760
    %v338 = vsub.f32 %v71, %v337
    %v339 = vand.u32 %v338, 4294901760
    %340 = vmatpush.msra.mxu0 %v339
    %v341 = vand.u32 %v70, 4294901760
    %v342 = vsub.f32 %v70, %v341
    %v343 = vand.u32 %v342, 4294901760
    %344 = vmatpush.msra.mxu0 %v343
    %v345 = vand.u32 %v69, 4294901760
    %v346 = vsub.f32 %v69, %v345
    %v347 = vand.u32 %v346, 4294901760
    %348 = vmatpush.msra.mxu0 %v347
    %v349 = vand.u32 %v68, 4294901760
    %v350 = vsub.f32 %v68, %v349
    %v351 = vand.u32 %v350, 4294901760
    %352 = vmatpush.msra.mxu0 %v351
    %v353 = vand.u32 %v67, 4294901760
    %v354 = vsub.f32 %v67, %v353
    %v355 = vand.u32 %v354, 4294901760
    %356 = vmatpush.msra.mxu0 %v355
    %v357 = vand.u32 %v66, 4294901760
    %v358 = vsub.f32 %v66, %v357
    %v359 = vand.u32 %v358, 4294901760
    %360 = vmatpush.msra.mxu0 %v359
    %v361 = vand.u32 %v65, 4294901760
    %v362 = vsub.f32 %v65, %v361
    %v363 = vand.u32 %v362, 4294901760
    %364 = vmatpush.msra.mxu0 %v363
    %v365 = vand.u32 %v64, 4294901760
    %v366 = vsub.f32 %v64, %v365
    %v367 = vand.u32 %v366, 4294901760
    %368 = vmatpush.msra.mxu0 %v367
    %v369 = vand.u32 %v63, 4294901760
    %v370 = vsub.f32 %v63, %v369
    %v371 = vand.u32 %v370, 4294901760
    %372 = vmatpush.msra.mxu0 %v371
    %v373 = vand.u32 %v62, 4294901760
    %v374 = vsub.f32 %v62, %v373
    %v375 = vand.u32 %v374, 4294901760
    %376 = vmatpush.msra.mxu0 %v375
    %v377 = vand.u32 %v61, 4294901760
    %378 = vmatmul.f32.gmra.mxu0 %v377
    %v379 = vpop.f32.mrf.mxu0
    %v380 = vadd.f32 %v311, %v379
    %381 = vdwg.mxu0
    %v382 = vand.u32 %v77, 4294901760
    %383 = vmatpush.msra.mxu0 %v382
    %v384 = vand.u32 %v76, 4294901760
    %385 = vmatpush.msra.mxu0 %v384
    %v386 = vand.u32 %v75, 4294901760
    %387 = vmatpush.msra.mxu0 %v386
    %v388 = vand.u32 %v74, 4294901760
    %389 = vmatpush.msra.mxu0 %v388
    %v390 = vand.u32 %v73, 4294901760
    %391 = vmatpush.msra.mxu0 %v390
    %v392 = vand.u32 %v72, 4294901760
    %393 = vmatpush.msra.mxu0 %v392
    %v394 = vand.u32 %v71, 4294901760
    %395 = vmatpush.msra.mxu0 %v394
    %v396 = vand.u32 %v70, 4294901760
    %397 = vmatpush.msra.mxu0 %v396
    %v398 = vand.u32 %v69, 4294901760
    %399 = vmatpush.msra.mxu0 %v398
    %v400 = vand.u32 %v68, 4294901760
    %401 = vmatpush.msra.mxu0 %v400
    %v402 = vand.u32 %v67, 4294901760
    %403 = vmatpush.msra.mxu0 %v402
    %v404 = vand.u32 %v66, 4294901760
    %405 = vmatpush.msra.mxu0 %v404
    %v406 = vand.u32 %v65, 4294901760
    %407 = vmatpush.msra.mxu0 %v406
    %v408 = vand.u32 %v64, 4294901760
    %409 = vmatpush.msra.mxu0 %v408
    %v410 = vand.u32 %v63, 4294901760
    %411 = vmatpush.msra.mxu0 %v410
    %v412 = vand.u32 %v62, 4294901760
    %413 = vmatpush.msra.mxu0 %v412
    %v414 = vand.u32 %v61, 4294901760
    %415 = vmatmul.f32.gmra.mxu0 %v414
    %v416 = vpop.f32.mrf.mxu0
    %v417 = vadd.f32 %v380, %v416
    %418 = vdwg.mxu0
    %v419 = vrsqrt.pop %v417
    %v420 = vmul.f32 %v419, %v417
    %v421 = vmul.f32 %v420, %v419
    %v422 = vmul.f32 0.5, %v421
    %v423 = vsub.f32 1.5, %v422
    %v424 = vmul.f32 %v419, %v423
    %vm425 = vweird.f32 %v417
    %vm426 = vweird.f32 %v419
    %vm427 = vmor %vm425, %vm426
    %v428 = vsel %vm427, %v419, %v424
    %v429 = vmul.f32 %v60, %v428
    %v430 = vld [vmem:[#allocation5] sm:$0x1]
    %v432 = vperm.slane %v430, 0
    %v434 = vmul.f32 %v429, %v432
    %435 = vst [vmem:[#allocation8] sm:$0xff] %v434
    // Predicated region
    $region26: #{tpu_custom_call.1} parent=1 // pred_check
      _
    $region27: #{tpu_custom_call.1} parent=1 // pred_check_branch
      %437 = sbr.rel (0) target = $region29
    $region28: #{tpu_custom_call.1} parent=1 // pred_region
      %439 = vsyncadd [#allocation4], 64
      %s440 = sshll.u32 [#allocation8], 4
      %s441 = int_to_ptr.vmem [resolvable:$true] %s440
      %s442 = sshll.u32 %s3, 4
      %s443 = int_to_ptr.hbm [resolvable:$true] %s442
      %448 = dma.vmem_to_hbm [thread:$0]  %s441, 64, %s443, [#allocation4], 64, 64, 4
    $region29: #{tpu_custom_call.1} parent=1 // pred_fallthru
      _
    // Predicated region
    $region30: #{tpu_custom_call.1} parent=1 // pred_check
      _
    $region31: #{tpu_custom_call.1} parent=1 // pred_check_branch
      %450 = sbr.rel (0) target = $region33
    $region32: #{tpu_custom_call.1} parent=1 // pred_region
      %452 = dma.done [#allocation4], 128
    $region33: #{tpu_custom_call.1} parent=1 // pred_fallthru
      _
    %453 = vsyncpa [#allocation3], 1
    %454 = vsyncpa [#allocation6], 1
    %455 = vsyncpa [#allocation4], 1

</llo_original>
